<compile_context>
chip_gen: v6e
topology: v6e:2x2x1
jax: 0.10.0
libtpu: 0.0.40
codegen_flags: <defaults>
</compile_context>

<pallas_src>
import functools

import jax
import jax.numpy as jnp
from jax.experimental import pallas as pl
from jax.experimental.pallas import tpu as pltpu


# --------------------------------------------------------------------------
# helpers
# --------------------------------------------------------------------------
def _round_up(x, m):
    return (x + m - 1) // m * m


def _largest_tile(dim, cap):
    """Largest multiple of 128 that is <= cap and divides dim (dim % 128 == 0)."""
    t = max(128, (min(dim, cap) // 128) * 128)
    while dim % t:
        t -= 128
    return t


def _pad_rows(m):
    # keep the row (sublane) dim 16-aligned for bf16 packing; big batches tile by 256
    return _round_up(m, 16) if m <= 256 else _round_up(m, 256)


# --------------------------------------------------------------------------
# per-layer kernel:  out = activation(x @ W + b)
# --------------------------------------------------------------------------
def _linear_act_kernel(x_ref, w_ref, b_ref, o_ref, acc_ref, *, act):
    """One (tm, tn) output tile; k (last grid axis) is the reduction axis.

    f32 accumulation lives in a VMEM scratch so the HBM output can be bf16.
    Bias is folded into the k==0 write (no separate init store + RMW).
    """
    k = pl.program_id(2)
    partial = jnp.dot(x_ref[...], w_ref[...], preferred_element_type=jnp.float32)

    @pl.when(k == 0)
    def _():
        acc_ref[...] = partial + b_ref[...]          # (1, tn) broadcasts

    @pl.when(k > 0)
    def _():
        acc_ref[...] += partial

    @pl.when(k == pl.num_programs(2) - 1)
    def _():
        v = acc_ref[...]
        if act == "relu":
            v = jnp.maximum(v, 0.0)
        elif act == "lrelu":                         # nn.LeakyReLU default slope
            v = jnp.where(v >= 0.0, v, 0.01 * v)
        o_ref[...] = v.astype(o_ref.dtype)


@functools.partial(jax.jit, static_argnames=("act", "out_dtype"))
def _linear_padded(x, weight, bias2d, *, act=None, out_dtype=jnp.float32):
    """activation(x @ weight + bias) on already-aligned operands.

    x:(Mp,Kp)  weight:(Kp,Np)  bias2d:(1,Np) f32.  Kp, Np multiples of 128.
    """
    Mp, Kp = x.shape
    Kw, Np = weight.shape
    assert Kp == Kw and Kp % 128 == 0 and Np % 128 == 0
    cs = jnp.dtype(x.dtype).itemsize
    osz = jnp.dtype(out_dtype).itemsize

    # ---- tile selection ---------------------------------------------------
    if Mp <= 256:
        tm = Mp
    else:
        tm = 256
        assert Mp % tm == 0
    tn_cap = 1024 if cs <= 2 else 512
    tk_cap = 1024 if cs <= 2 else 512
    ncap = tn_cap
    if Mp <= 256 and Np >= 256:
        # single i-step: keep >= 2 j-steps so v7x's two TensorCores both work
        ncap = min(ncap, max(128, Np // 2))
    tn = _largest_tile(Np, ncap)
    tk = _largest_tile(Kp, tk_cap)
    nk = Kp // tk
    grid = (Mp // tm, Np // tn, nk)

    # ---- weight spec: deeper buffering in the weight-streaming regime ------
    n_wbuf = 2
    w_spec = pl.BlockSpec((tk, tn), lambda i, j, k: (k, j))
    if Mp <= 256 and (Np // tn) * nk >= 3:
        try:
            w_spec = pl.BlockSpec((tk, tn), lambda i, j, k: (k, j),
                                  pipeline_mode=pl.Buffered(3))
            n_wbuf = 3
        except TypeError:
            pass  # older API without pipeline_mode; stay double-buffered

    work_bytes = (2 * tm * tk * cs + n_wbuf * tk * tn * cs
                  + 2 * tm * tn * osz + tm * tn * 4 + 2 * tn * 4)
    vmem_limit = int(min(max(2 * work_bytes, 32 << 20), 48 << 20))

    cost = pl.CostEstimate(
        flops=2 * Mp * Np * Kp,
        transcendentals=0,
        bytes_accessed=(Mp * Kp * cs * (Np // tn)       # x re-read per j pass
                        + Kp * Np * cs * (Mp // tm)     # W re-read per i pass
                        + Np * 4 * (Mp // tm)
                        + Mp * Np * osz),
    )

    kernel = functools.partial(_linear_act_kernel, act=act)
    return pl.pallas_call(
        kernel,
        out_shape=jax.ShapeDtypeStruct((Mp, Np), out_dtype),
        grid_spec=pltpu.PrefetchScalarGridSpec(
            num_scalar_prefetch=0,
            grid=grid,
            in_specs=[
                pl.BlockSpec((tm, tk), lambda i, j, k: (i, k)),   # x tile
                w_spec,                                           # weight tile
                pl.BlockSpec((1, tn), lambda i, j, k: (0, j)),    # bias tile
            ],
            out_specs=pl.BlockSpec((tm, tn), lambda i, j, k: (i, j)),
            scratch_shapes=[pltpu.VMEM((tm, tn), jnp.float32)],   # f32 accumulator
        ),
        compiler_params=pltpu.CompilerParams(
            dimension_semantics=("parallel", "parallel", "arbitrary"),
            vmem_limit_bytes=vmem_limit,
        ),
        cost_estimate=cost,
    )(x, weight, bias2d)


def linear(x, weight, bias, *, act=None, compute_dtype=jnp.bfloat16,
           out_dtype=jnp.float32):
    """Standalone activation(x @ W + b). x:[M,K] W:[K,N] b:[N] -> [M,N] (out_dtype)."""
    M, K = x.shape
    Kw, N = weight.shape
    assert K == Kw and bias.shape == (N,)
    Kp, Np = _round_up(K, 128), _round_up(N, 128)
    Mp = _pad_rows(M)
    xp = x.astype(compute_dtype)
    if (Mp, Kp) != (M, K):
        xp = jnp.pad(xp, ((0, Mp - M), (0, Kp - K)))
    wp = weight.astype(compute_dtype)
    if (Kp, Np) != (K, N):
        wp = jnp.pad(wp, ((0, Kp - K), (0, Np - N)))
    bp = bias.astype(jnp.float32)
    if Np != N:
        bp = jnp.pad(bp, (0, Np - N))
    out = _linear_padded(xp, wp, bp.reshape(1, Np), act=act, out_dtype=out_dtype)
    return out[:M, :N] if (Mp, Np) != (M, N) else out


# --------------------------------------------------------------------------
# fused whole-MLP kernel (small-batch / weight-streaming regime)
# --------------------------------------------------------------------------
def _mlp_fused_kernel(x_ref, w_ref, b_ref, o_ref, act0_ref, act1_ref, acc_ref, *,
                      act, n_layers, tk, tn):
    """Grid = (layer, out-tile j, reduce-tile k).  Activations stay resident in
    VMEM (ping-pong between act0/act1); only the stacked weights stream."""
    l = pl.program_id(0)
    j = pl.program_id(1)
    k = pl.program_id(2)
    nk = pl.num_programs(2)
    kin_pad = x_ref.shape[1]

    # One-time init: zero both activation slabs (so padded / unwritten columns
    # multiply as exact zeros), copy the input into slot 0.
    @pl.when((l == 0) & (j == 0) & (k == 0))
    def _():
        act0_ref[...] = jnp.zeros(act0_ref.shape, act0_ref.dtype)
        act1_ref[...] = jnp.zeros(act1_ref.shape, act1_ref.dtype)
        act0_ref[:, :kin_pad] = x_ref[...]

    koff = pl.multiple_of(k * tk, 128)
    joff = pl.multiple_of(j * tn, 128)

    def step(src_ref, dst_ref):
        partial = jnp.dot(src_ref[:, pl.ds(koff, tk)], w_ref[0],
                          preferred_element_type=jnp.float32)

        @pl.when(k == 0)
        def _():
            acc_ref[...] = partial + b_ref[0]        # (1, tn) broadcasts

        @pl.when(k > 0)
        def _():
            acc_ref[...] += partial

        @pl.when(k == nk - 1)
        def _():
            v = acc_ref[...]
            if act == "relu":
                a = jnp.maximum(v, 0.0)
            else:                                    # lrelu, slope 0.01
                a = jnp.where(v >= 0.0, v, 0.01 * v)
            res = jnp.where(l == n_layers - 1, v, a)  # last layer: no activation
            dst_ref[:, pl.ds(joff, tn)] = res.astype(dst_ref.dtype)

            @pl.when(l == n_layers - 1)
            def _():
                o_ref[:, pl.ds(joff, tn)] = res.astype(o_ref.dtype)

    # even layers read slot0 -> write slot1; odd layers the reverse
    @pl.when(l % 2 == 0)
    def _():
        step(act0_ref, act1_ref)

    @pl.when(l % 2 == 1)
    def _():
        step(act1_ref, act0_ref)


@functools.partial(jax.jit, static_argnames=("act", "n_layers"))
def _mlp_fused(x_pad, w_stack, b_stack, *, act, n_layers):
    Mp, kin_pad = x_pad.shape
    L, Kall, Nall = w_stack.shape
    assert L == n_layers
    cdt = x_pad.dtype
    cs = jnp.dtype(cdt).itemsize
    w_act = max(Kall, Nall)

    tk = _largest_tile(Kall, 512)
    tn = _largest_tile(Nall, 512)
    grid = (n_layers, Nall // tn, Kall // tk)

    resident = (Mp * kin_pad * cs + Mp * Nall * 4
                + 2 * Mp * w_act * cs + Mp * tn * 4)
    streamed = 2 * (tk * tn * cs + tn * 4)
    vmem_limit = int(min(max(2 * (resident + streamed), 32 << 20), 48 << 20))

    cost = pl.CostEstimate(
        flops=2 * Mp * Kall * Nall * n_layers,
        transcendentals=0,
        bytes_accessed=(n_layers * Kall * Nall * cs + n_layers * Nall * 4
                        + Mp * kin_pad * cs + Mp * Nall * 4),
    )

    kernel = functools.partial(_mlp_fused_kernel, act=act, n_layers=n_layers,
                               tk=tk, tn=tn)
    return pl.pallas_call(
        kernel,
        out_shape=jax.ShapeDtypeStruct((Mp, Nall), jnp.float32),
        grid_spec=pltpu.PrefetchScalarGridSpec(
            num_scalar_prefetch=0,
            grid=grid,
            in_specs=[
                pl.BlockSpec((Mp, kin_pad), lambda l, j, k: (0, 0)),    # x resident
                pl.BlockSpec((1, tk, tn), lambda l, j, k: (l, k, j)),   # weight tile
                pl.BlockSpec((1, 1, tn), lambda l, j, k: (l, 0, j)),    # bias tile
            ],
            out_specs=pl.BlockSpec((Mp, Nall), lambda l, j, k: (0, 0)),  # resident
            scratch_shapes=[
                pltpu.VMEM((Mp, w_act), cdt),        # activation slot 0
                pltpu.VMEM((Mp, w_act), cdt),        # activation slot 1
                pltpu.VMEM((Mp, tn), jnp.float32),   # f32 accumulator
            ],
        ),
        compiler_params=pltpu.CompilerParams(
            # Layers chain through VMEM scratch -> every axis must stay on one core.
            dimension_semantics=("arbitrary", "arbitrary", "arbitrary"),
            vmem_limit_bytes=vmem_limit,
        ),
        cost_estimate=cost,
    )(x_pad, w_stack, b_stack)


# --------------------------------------------------------------------------
# MLP parameter handling + forward
# --------------------------------------------------------------------------
def init_mlp_params(key, in_features, hidden_features, out_features, num_layers=2):
    """Mirror the PyTorch module init: weight ~ randn, bias = zeros (f32)."""
    dims = [in_features] + [hidden_features] * (num_layers - 1) + [out_features]
    params = []
    for i in range(num_layers):
        key, sub = jax.random.split(key)
        w = jax.random.normal(sub, (dims[i], dims[i + 1]), dtype=jnp.float32)
        b = jnp.zeros((dims[i + 1],), dtype=jnp.float32)
        params.append((w, b))
    return params


def prepare_mlp_params(params, compute_dtype=jnp.bfloat16):
    """Pad/cast parameters ONCE (no per-forward weight padding copies)."""
    padded = []
    for w, b in params:
        K, N = w.shape
        Kp, Np = _round_up(K, 128), _round_up(N, 128)
        wp = jnp.pad(w, ((0, Kp - K), (0, Np - N))).astype(compute_dtype)
        bp = jnp.pad(b, (0, Np - N)).astype(jnp.float32)
        padded.append((wp, bp))
    Kall = max(w.shape[0] for w, _ in padded)
    Nall = max(w.shape[1] for w, _ in padded)
    w_stack = jnp.stack([jnp.pad(w, ((0, Kall - w.shape[0]), (0, Nall - w.shape[1])))
                         for w, _ in padded])                       # (L,Kall,Nall)
    b_stack = jnp.stack([jnp.pad(b, (0, Nall - b.shape[0]))[None, :]
                         for _, b in padded])                       # (L,1,Nall) f32
    return {
        "layers": padded,
        "w_stack": w_stack,
        "b_stack": b_stack,
        "in_features": params[0][0].shape[0],
        "out_features": params[-1][0].shape[1],
        "kin_pad": padded[0][0].shape[0],
        "compute_dtype": compute_dtype,
    }


def mlp_forward(prepared, x, act="relu", fuse=None):
    """act(in_linear) -> act(hidden...) -> out_linear. Returns f32 [batch, out]."""
    assert act in ("relu", "lrelu")
    M, K = x.shape
    assert K == prepared["in_features"]
    cdt = prepared["compute_dtype"]
    kin_pad = prepared["kin_pad"]
    Mp = _pad_rows(M)

    xp = x.astype(cdt)
    if (Mp, kin_pad) != (M, K):
        xp = jnp.pad(xp, ((0, Mp - M), (0, kin_pad - K)))

    L, Kall, Nall = prepared["w_stack"].shape
    if fuse is None:
        fuse = (Mp <= 256 and max(Kall, Nall) <= 2048)

    if fuse:
        out = _mlp_fused(xp, prepared["w_stack"], prepared["b_stack"],
                         act=act, n_layers=L)
        return out[:M, :prepared["out_features"]]

    # per-layer path (large batch / large hidden dims): activations stay padded
    # and in bf16 between layers; the final layer emits f32.
    h = xp
    for idx, (wp, bp) in enumerate(prepared["layers"]):
        last = idx == L - 1
        h = _linear_padded(h, wp, bp.reshape(1, -1),
                           act=None if last else act,
                           out_dtype=jnp.float32 if last else cdt)
    return h[:M, :prepared["out_features"]]


def mlp_reference(params, x, act="relu", compute_dtype=jnp.bfloat16):
    """Pure-JAX reference with the same dtype contract (bf16 operands, f32 acc)."""
    def f(v):
        return jnp.maximum(v, 0.0) if act == "relu" else jnp.where(v >= 0.0, v, 0.01 * v)
    h = x.astype(compute_dtype)
    L = len(params)
    for i, (w, b) in enumerate(params):
        y = jnp.dot(h, w.astype(compute_dtype),
                    preferred_element_type=jnp.float32) + b
        if i == L - 1:
            return y
        h = f(y).astype(compute_dtype)


# --------------------------------------------------------------------------
if __name__ == "__main__":
    batch, in_features, hidden_features, out_features = 8, 32, 64, 16
    num_layers = 3   # in_linear + 1 hidden linear + out_linear

    key = jax.random.PRNGKey(0)
    key, kx = jax.random.split(key)
    x = jax.random.normal(kx, (batch, in_features), dtype=jnp.float32)
    params = init_mlp_params(key, in_features, hidden_features, out_features,
                             num_layers)
    prepared = prepare_mlp_params(params)

    for act in ("relu", "lrelu"):
        ref = mlp_reference(params, x, act)
        out_fused = jax.block_until_ready(mlp_forward(prepared, x, act=act, fuse=True))
        out_layer = jax.block_until_ready(mlp_forward(prepared, x, act=act, fuse=False))
        assert out_fused.shape == (batch, out_features)
        assert out_layer.shape == (batch, out_features)
        assert jnp.allclose(out_fused, ref, atol=1e-2, rtol=1e-2), f"fused {act} mismatch"
        assert jnp.allclose(out_layer, ref, atol=1e-2, rtol=1e-2), f"per-layer {act} mismatch"

    # also exercise the standalone fused linear kernel
    w0, b0 = params[0]
    lin = jax.block_until_ready(linear(x, w0, b0, act="relu"))
    lin_ref = jnp.maximum(
        jnp.dot(x.astype(jnp.bfloat16), w0.astype(jnp.bfloat16),
                preferred_element_type=jnp.float32) + b0, 0.0)
    assert jnp.allclose(lin, lin_ref, atol=1e-2, rtol=1e-2), "linear mismatch"

    print("KERNEL_OK")
</pallas_src>

<mosaic_0001>
module attributes {stable_mosaic.version = 11 : i64} {
  func.func @_mlp_fused_kernel(%arg0: i32, %arg1: i32, %arg2: i32, %arg3: memref<16x128xbf16, #tpu.memory_space<vmem>>, %arg4: memref<1x128x128xbf16, #tpu.memory_space<vmem>>, %arg5: memref<1x1x128xf32, #tpu.memory_space<vmem>>, %arg6: memref<16x128xf32, #tpu.memory_space<vmem>>, %arg7: memref<16x128xbf16, #tpu.memory_space<vmem>>, %arg8: memref<16x128xbf16, #tpu.memory_space<vmem>>, %arg9: memref<16x128xf32, #tpu.memory_space<vmem>>) attributes {dimension_semantics = [#tpu.dimension_semantics<arbitrary>, #tpu.dimension_semantics<arbitrary>, #tpu.dimension_semantics<arbitrary>], iteration_bounds = array<i64: 3, 1, 1>, scalar_prefetch = 0 : i64, scratch_operands = 3 : i64, tpu.core_type = #tpu.core_type<tc>, window_params = [{pipeline_mode = #tpu.pipeline_mode<synchronous>, transform_indices = @transform_0, window_bounds = array<i64: 16, 128>}, {transform_indices = @transform_1, window_bounds = array<i64: 1, 128, 128>}, {transform_indices = @transform_2, window_bounds = array<i64: 1, 1, 128>}, {pipeline_mode = #tpu.pipeline_mode<synchronous>, transform_indices = @transform_3, window_bounds = array<i64: 16, 128>}]} {
    %c0_i32 = arith.constant 0 : i32
    %0 = arith.cmpi eq, %arg0, %c0_i32 : i32
    %c0_i32_0 = arith.constant 0 : i32
    %1 = arith.cmpi eq, %arg1, %c0_i32_0 : i32
    %2 = arith.andi %0, %1 : i1
    %c0_i32_1 = arith.constant 0 : i32
    %3 = arith.cmpi eq, %arg2, %c0_i32_1 : i32
    %4 = arith.andi %2, %3 : i1
    %5 = arith.extui %4 : i1 to i32
    %c0_i32_2 = arith.constant 0 : i32
    %6 = arith.cmpi ne, %5, %c0_i32_2 : i32
    scf.if %6 {
      %cst = arith.constant 0.000000e+00 : bf16
      %37 = vector.broadcast %cst : bf16 to vector<16x128xbf16>
      %c0 = arith.constant 0 : index
      %c0_18 = arith.constant 0 : index
      %38 = vector.load %arg7[%c0, %c0_18] : memref<16x128xbf16, #tpu.memory_space<vmem>>, vector<16x128xbf16>
      tpu.vector_store %arg7[%c0, %c0_18], %37 {strides = array<i32>} : memref<16x128xbf16, #tpu.memory_space<vmem>>, vector<16x128xbf16>,
      %cst_19 = arith.constant 0.000000e+00 : bf16
      %39 = vector.broadcast %cst_19 : bf16 to vector<16x128xbf16>
      %c0_20 = arith.constant 0 : index
      %c0_21 = arith.constant 0 : index
      %40 = vector.load %arg8[%c0_20, %c0_21] : memref<16x128xbf16, #tpu.memory_space<vmem>>, vector<16x128xbf16>
      tpu.vector_store %arg8[%c0_20, %c0_21], %39 {strides = array<i32>} : memref<16x128xbf16, #tpu.memory_space<vmem>>, vector<16x128xbf16>,
      %c0_22 = arith.constant 0 : index
      %c0_23 = arith.constant 0 : index
      %41 = vector.load %arg3[%c0_22, %c0_23] : memref<16x128xbf16, #tpu.memory_space<vmem>>, vector<16x128xbf16>
      %c0_24 = arith.constant 0 : index
      %c0_25 = arith.constant 0 : index
      %42 = vector.load %arg7[%c0_24, %c0_25] : memref<16x128xbf16, #tpu.memory_space<vmem>>, vector<16x128xbf16>
      tpu.vector_store %arg7[%c0_24, %c0_25], %41 {strides = array<i32>} : memref<16x128xbf16, #tpu.memory_space<vmem>>, vector<16x128xbf16>,
    } else {
    }
    %c128_i32 = arith.constant 128 : i32
    %7 = arith.muli %arg2, %c128_i32 : i32
    %8 = tpu.assume_multiple %7, 128 : i32
    %c128_i32_3 = arith.constant 128 : i32
    %9 = arith.muli %arg1, %c128_i32_3 : i32
    %10 = tpu.assume_multiple %9, 128 : i32
    %c2_i32 = arith.constant 2 : i32
    %c0_i32_4 = arith.constant 0 : i32
    %11 = arith.cmpi eq, %c2_i32, %c0_i32_4 : i32
    %c1_i32 = arith.constant 1 : i32
    %12 = arith.select %11, %c1_i32, %c2_i32 : i32
    %13 = arith.remsi %arg0, %12 : i32
    %c0_i32_5 = arith.constant 0 : i32
    %14 = arith.cmpi ne, %13, %c0_i32_5 : i32
    %c0_i32_6 = arith.constant 0 : i32
    %15 = arith.cmpi slt, %13, %c0_i32_6 : i32
    %c0_i32_7 = arith.constant 0 : i32
    %16 = arith.cmpi slt, %12, %c0_i32_7 : i32
    %17 = arith.xori %15, %16 : i1
    %18 = arith.andi %17, %14 : i1
    %19 = arith.addi %13, %12 : i32
    %20 = arith.select %18, %19, %13 : i32
    %c0_i32_8 = arith.constant 0 : i32
    %21 = arith.cmpi eq, %20, %c0_i32_8 : i32
    %22 = arith.extui %21 : i1 to i32
    %c0_i32_9 = arith.constant 0 : i32
    %23 = arith.cmpi ne, %22, %c0_i32_9 : i32
    scf.if %23 {
      %c0 = arith.constant 0 : index
      %37 = arith.index_cast %8 : i32 to index
      %38 = vector.load %arg7[%c0, %37] : memref<16x128xbf16, #tpu.memory_space<vmem>>, vector<16x128xbf16>
      %c0_18 = arith.constant 0 : index
      %c0_19 = arith.constant 0 : index
      %c0_20 = arith.constant 0 : index
      %39 = vector.load %arg4[%c0_18, %c0_19, %c0_20] : memref<1x128x128xbf16, #tpu.memory_space<vmem>>, vector<1x128x128xbf16>
      %40 = vector.shape_cast %39 : vector<1x128x128xbf16> to vector<128x128xbf16>
      %cst = arith.constant dense<0.000000e+00> : vector<16x128xf32>
      %41 = tpu.matmul %38, %40, %cst {dimension_numbers = #tpu.dot_dimension_numbers<[1], [0], [0], [1], [0, 0, 1, 1], [], []>} : vector<16x128xbf16>, vector<128x128xbf16>, vector<16x128xf32> -> vector<16x128xf32>
      %c0_i32_21 = arith.constant 0 : i32
      %42 = arith.cmpi eq, %arg2, %c0_i32_21 : i32
      %43 = arith.extui %42 : i1 to i32
      %c0_i32_22 = arith.constant 0 : i32
      %44 = arith.cmpi ne, %43, %c0_i32_22 : i32
      scf.if %44 {
        %c0_27 = arith.constant 0 : index
        %c0_28 = arith.constant 0 : index
        %c0_29 = arith.constant 0 : index
        %51 = vector.load %arg5[%c0_27, %c0_28, %c0_29] : memref<1x1x128xf32, #tpu.memory_space<vmem>>, vector<1x1x128xf32>
        %52 = vector.shape_cast %51 : vector<1x1x128xf32> to vector<1x128xf32>
        %53 = vector.broadcast %52 : vector<1x128xf32> to vector<16x128xf32>
        %54 = arith.addf %41, %53 : vector<16x128xf32>
        %c0_30 = arith.constant 0 : index
        %c0_31 = arith.constant 0 : index
        %55 = vector.load %arg9[%c0_30, %c0_31] : memref<16x128xf32, #tpu.memory_space<vmem>>, vector<16x128xf32>
        tpu.vector_store %arg9[%c0_30, %c0_31], %54 {strides = array<i32>} : memref<16x128xf32, #tpu.memory_space<vmem>>, vector<16x128xf32>,
      } else {
      }
      %c0_i32_23 = arith.constant 0 : i32
      %45 = arith.cmpi sgt, %arg2, %c0_i32_23 : i32
      %46 = arith.extui %45 : i1 to i32
      %c0_i32_24 = arith.constant 0 : i32
      %47 = arith.cmpi ne, %46, %c0_i32_24 : i32
      scf.if %47 {
        %c0_27 = arith.constant 0 : index
        %c0_28 = arith.constant 0 : index
        %51 = vector.load %arg9[%c0_27, %c0_28] : memref<16x128xf32, #tpu.memory_space<vmem>>, vector<16x128xf32>
        %52 = arith.addf %51, %41 : vector<16x128xf32>
        %c0_29 = arith.constant 0 : index
        %c0_30 = arith.constant 0 : index
        %53 = vector.load %arg9[%c0_29, %c0_30] : memref<16x128xf32, #tpu.memory_space<vmem>>, vector<16x128xf32>
        tpu.vector_store %arg9[%c0_29, %c0_30], %52 {strides = array<i32>} : memref<16x128xf32, #tpu.memory_space<vmem>>, vector<16x128xf32>,
      } else {
      }
      %c0_i32_25 = arith.constant 0 : i32
      %48 = arith.cmpi eq, %arg2, %c0_i32_25 : i32
      %49 = arith.extui %48 : i1 to i32
      %c0_i32_26 = arith.constant 0 : i32
      %50 = arith.cmpi ne, %49, %c0_i32_26 : i32
      scf.if %50 {
        %c0_27 = arith.constant 0 : index
        %c0_28 = arith.constant 0 : index
        %51 = vector.load %arg9[%c0_27, %c0_28] : memref<16x128xf32, #tpu.memory_space<vmem>>, vector<16x128xf32>
        %cst_29 = arith.constant 0.000000e+00 : f32
        %52 = vector.broadcast %cst_29 : f32 to vector<16x128xf32>
        %53 = arith.maximumf %51, %52 : vector<16x128xf32>
        %c2_i32_30 = arith.constant 2 : i32
        %54 = arith.cmpi eq, %arg0, %c2_i32_30 : i32
        %55 = arith.select %54, %51, %53 : vector<16x128xf32>
        %56 = arith.truncf %55 : vector<16x128xf32> to vector<16x128xbf16>
        %c0_31 = arith.constant 0 : index
        %57 = arith.index_cast %10 : i32 to index
        %58 = vector.load %arg8[%c0_31, %57] : memref<16x128xbf16, #tpu.memory_space<vmem>>, vector<16x128xbf16>
        tpu.vector_store %arg8[%c0_31, %57], %56 {strides = array<i32>} : memref<16x128xbf16, #tpu.memory_space<vmem>>, vector<16x128xbf16>,
        %c2_i32_32 = arith.constant 2 : i32
        %59 = arith.cmpi eq, %arg0, %c2_i32_32 : i32
        %60 = arith.extui %59 : i1 to i32
        %c0_i32_33 = arith.constant 0 : i32
        %61 = arith.cmpi ne, %60, %c0_i32_33 : i32
        scf.if %61 {
          %c0_34 = arith.constant 0 : index
          %62 = arith.index_cast %10 : i32 to index
          %63 = vector.load %arg6[%c0_34, %62] : memref<16x128xf32, #tpu.memory_space<vmem>>, vector<16x128xf32>
          tpu.vector_store %arg6[%c0_34, %62], %55 {strides = array<i32>} : memref<16x128xf32, #tpu.memory_space<vmem>>, vector<16x128xf32>,
        } else {
        }
      } else {
      }
    } else {
    }
    %c2_i32_10 = arith.constant 2 : i32
    %c0_i32_11 = arith.constant 0 : i32
    %24 = arith.cmpi eq, %c2_i32_10, %c0_i32_11 : i32
    %c1_i32_12 = arith.constant 1 : i32
    %25 = arith.select %24, %c1_i32_12, %c2_i32_10 : i32
    %26 = arith.remsi %arg0, %25 : i32
    %c0_i32_13 = arith.constant 0 : i32
    %27 = arith.cmpi ne, %26, %c0_i32_13 : i32
    %c0_i32_14 = arith.constant 0 : i32
    %28 = arith.cmpi slt, %26, %c0_i32_14 : i32
    %c0_i32_15 = arith.constant 0 : i32
    %29 = arith.cmpi slt, %25, %c0_i32_15 : i32
    %30 = arith.xori %28, %29 : i1
    %31 = arith.andi %30, %27 : i1
    %32 = arith.addi %26, %25 : i32
    %33 = arith.select %31, %32, %26 : i32
    %c1_i32_16 = arith.constant 1 : i32
    %34 = arith.cmpi eq, %33, %c1_i32_16 : i32
    %35 = arith.extui %34 : i1 to i32
    %c0_i32_17 = arith.constant 0 : i32
    %36 = arith.cmpi ne, %35, %c0_i32_17 : i32
    scf.if %36 {
      %c0 = arith.constant 0 : index
      %37 = arith.index_cast %8 : i32 to index
      %38 = vector.load %arg8[%c0, %37] : memref<16x128xbf16, #tpu.memory_space<vmem>>, vector<16x128xbf16>
      %c0_18 = arith.constant 0 : index
      %c0_19 = arith.constant 0 : index
      %c0_20 = arith.constant 0 : index
      %39 = vector.load %arg4[%c0_18, %c0_19, %c0_20] : memref<1x128x128xbf16, #tpu.memory_space<vmem>>, vector<1x128x128xbf16>
      %40 = vector.shape_cast %39 : vector<1x128x128xbf16> to vector<128x128xbf16>
      %cst = arith.constant dense<0.000000e+00> : vector<16x128xf32>
      %41 = tpu.matmul %38, %40, %cst {dimension_numbers = #tpu.dot_dimension_numbers<[1], [0], [0], [1], [0, 0, 1, 1], [], []>} : vector<16x128xbf16>, vector<128x128xbf16>, vector<16x128xf32> -> vector<16x128xf32>
      %c0_i32_21 = arith.constant 0 : i32
      %42 = arith.cmpi eq, %arg2, %c0_i32_21 : i32
      %43 = arith.extui %42 : i1 to i32
      %c0_i32_22 = arith.constant 0 : i32
      %44 = arith.cmpi ne, %43, %c0_i32_22 : i32
      scf.if %44 {
        %c0_27 = arith.constant 0 : index
        %c0_28 = arith.constant 0 : index
        %c0_29 = arith.constant 0 : index
        %51 = vector.load %arg5[%c0_27, %c0_28, %c0_29] : memref<1x1x128xf32, #tpu.memory_space<vmem>>, vector<1x1x128xf32>
        %52 = vector.shape_cast %51 : vector<1x1x128xf32> to vector<1x128xf32>
        %53 = vector.broadcast %52 : vector<1x128xf32> to vector<16x128xf32>
        %54 = arith.addf %41, %53 : vector<16x128xf32>
        %c0_30 = arith.constant 0 : index
        %c0_31 = arith.constant 0 : index
        %55 = vector.load %arg9[%c0_30, %c0_31] : memref<16x128xf32, #tpu.memory_space<vmem>>, vector<16x128xf32>
        tpu.vector_store %arg9[%c0_30, %c0_31], %54 {strides = array<i32>} : memref<16x128xf32, #tpu.memory_space<vmem>>, vector<16x128xf32>,
      } else {
      }
      %c0_i32_23 = arith.constant 0 : i32
      %45 = arith.cmpi sgt, %arg2, %c0_i32_23 : i32
      %46 = arith.extui %45 : i1 to i32
      %c0_i32_24 = arith.constant 0 : i32
      %47 = arith.cmpi ne, %46, %c0_i32_24 : i32
      scf.if %47 {
        %c0_27 = arith.constant 0 : index
        %c0_28 = arith.constant 0 : index
        %51 = vector.load %arg9[%c0_27, %c0_28] : memref<16x128xf32, #tpu.memory_space<vmem>>, vector<16x128xf32>
        %52 = arith.addf %51, %41 : vector<16x128xf32>
        %c0_29 = arith.constant 0 : index
        %c0_30 = arith.constant 0 : index
        %53 = vector.load %arg9[%c0_29, %c0_30] : memref<16x128xf32, #tpu.memory_space<vmem>>, vector<16x128xf32>
        tpu.vector_store %arg9[%c0_29, %c0_30], %52 {strides = array<i32>} : memref<16x128xf32, #tpu.memory_space<vmem>>, vector<16x128xf32>,
      } else {
      }
      %c0_i32_25 = arith.constant 0 : i32
      %48 = arith.cmpi eq, %arg2, %c0_i32_25 : i32
      %49 = arith.extui %48 : i1 to i32
      %c0_i32_26 = arith.constant 0 : i32
      %50 = arith.cmpi ne, %49, %c0_i32_26 : i32
      scf.if %50 {
        %c0_27 = arith.constant 0 : index
        %c0_28 = arith.constant 0 : index
        %51 = vector.load %arg9[%c0_27, %c0_28] : memref<16x128xf32, #tpu.memory_space<vmem>>, vector<16x128xf32>
        %cst_29 = arith.constant 0.000000e+00 : f32
        %52 = vector.broadcast %cst_29 : f32 to vector<16x128xf32>
        %53 = arith.maximumf %51, %52 : vector<16x128xf32>
        %c2_i32_30 = arith.constant 2 : i32
        %54 = arith.cmpi eq, %arg0, %c2_i32_30 : i32
        %55 = arith.select %54, %51, %53 : vector<16x128xf32>
        %56 = arith.truncf %55 : vector<16x128xf32> to vector<16x128xbf16>
        %c0_31 = arith.constant 0 : index
        %57 = arith.index_cast %10 : i32 to index
        %58 = vector.load %arg7[%c0_31, %57] : memref<16x128xbf16, #tpu.memory_space<vmem>>, vector<16x128xbf16>
        tpu.vector_store %arg7[%c0_31, %57], %56 {strides = array<i32>} : memref<16x128xbf16, #tpu.memory_space<vmem>>, vector<16x128xbf16>,
        %c2_i32_32 = arith.constant 2 : i32
        %59 = arith.cmpi eq, %arg0, %c2_i32_32 : i32
        %60 = arith.extui %59 : i1 to i32
        %c0_i32_33 = arith.constant 0 : i32
        %61 = arith.cmpi ne, %60, %c0_i32_33 : i32
        scf.if %61 {
          %c0_34 = arith.constant 0 : index
          %62 = arith.index_cast %10 : i32 to index
          %63 = vector.load %arg6[%c0_34, %62] : memref<16x128xf32, #tpu.memory_space<vmem>>, vector<16x128xf32>
          tpu.vector_store %arg6[%c0_34, %62], %55 {strides = array<i32>} : memref<16x128xf32, #tpu.memory_space<vmem>>, vector<16x128xf32>,
        } else {
        }
      } else {
      }
    } else {
    }
    return
  }
  func.func @transform_0(%arg0: i32, %arg1: i32, %arg2: i32) -> (i32, i32) {
    %c0_i32 = arith.constant 0 : i32
    %c0_i32_0 = arith.constant 0 : i32
    %c0_i32_1 = arith.constant 0 : i32
    return %c0_i32, %c0_i32_0 : i32, i32
  }
  func.func @transform_1(%arg0: i32, %arg1: i32, %arg2: i32) -> (i32, i32, i32) {
    %c0_i32 = arith.constant 0 : i32
    return %arg0, %arg2, %arg1 : i32, i32, i32
  }
  func.func @transform_2(%arg0: i32, %arg1: i32, %arg2: i32) -> (i32, i32, i32) {
    %c0_i32 = arith.constant 0 : i32
    %c0_i32_0 = arith.constant 0 : i32
    return %arg0, %c0_i32, %arg1 : i32, i32, i32
  }
  func.func @transform_3(%arg0: i32, %arg1: i32, %arg2: i32) -> (i32, i32) {
    %c0_i32 = arith.constant 0 : i32
    %c0_i32_0 = arith.constant 0 : i32
    %c0_i32_1 = arith.constant 0 : i32
    return %c0_i32, %c0_i32_0 : i32, i32
  }
}

</mosaic_0001>

<llo_original>
// kernel: _mlp_fused.1
$region0: #{_mlp_fused.1}
  #allocation0 [shape = 'u32[]', space=smem, size = 0x4, offset = 0x4, fixed_abs, tag = 'smem constant byte address 0x4 - core index']
  #allocation1 [shape = 'u32[144,128]{1,0:T(1,128)}', space=vmem, size = 0x12000, scoped, tag = 'internal scratch']
  #allocation2 [shape = 'bf16[16,128]{1,0:T(8,128)(2,1)}', space=vmem, size = 0x1000, scoped, tag = 'scratch operand']
  #allocation3 [shape = 'bf16[16,128]{1,0:T(8,128)(2,1)}', space=vmem, size = 0x1000, scoped, tag = 'scratch operand']
  #allocation4 [shape = 'f32[16,128]{1,0:T(8,128)}', space=vmem, size = 0x2000, scoped, tag = 'scratch operand']
  %s0 = inlined_call_operand.hbm [shape: bf16[16,128], index: 0, kind: input, shape index: {}]
  %s1 = inlined_call_operand.hbm [shape: bf16[3,128,128], index: 1, kind: input, shape index: {}]
  %s2 = inlined_call_operand.vmem [shape: f32[3,1,128], index: 2, kind: input, shape index: {}]
  %s3 = inlined_call_operand.hbm [shape: f32[16,128], index: 3, kind: output, shape index: {}]
  %s4 = sld [smem:[#allocation0]]
  $region97: #{_mlp_fused.1} parent=0
    _
  %s6 = ssub.s32 1, %s4
  %s7 = scalar_select 0, %s6, %s4
  $region1: #{_mlp_fused.1} parent=0
    #allocation5 [shape = 'u8[4096]{0}', space=vmem, size = 0x1000, scoped, tag = 'input window, operand 0, single buffered']
    #allocation6 [shape = 's32[2]{0}', space=sflag, size = 0x8, scoped, tag = 'scoped memory for _mlp_fused.1']
    #allocation7 [shape = 's32[2]{0}', space=sflag, size = 0x8, scoped, tag = 'scoped memory for _mlp_fused.1']
    #allocation8 [shape = 'u8[65536]{0}', space=vmem, size = 0x10000, scoped, tag = 'input window, operand 1']
    #allocation9 [shape = 's32[2]{0}', space=sflag, size = 0x8, scoped, tag = 'scoped memory for _mlp_fused.1']
    #allocation10 [shape = 'u8[8192]{0}', space=vmem, size = 0x2000, scoped, tag = 'output window, operand 0, single buffered']
    %8 = vsyncpa [#allocation6], 0
    %9 = vsyncpa [#allocation9], 0
    %s10 = scalar_lea.sflag [#allocation9], 1
    %11 = vsyncpa %s10, 0
    %12 = vsyncpa [#allocation7], 0
    loop: start=0, step=1, limit=5
    $region2: #{_mlp_fused.1} parent=1 // loop_pre_header
      _
    $region3: #{_mlp_fused.1} parent=1 // loop_header
      %s14 = sphi 0, %s18
      %p15 = scmp.ge.s32.totalorder %s14, 5
      %s21 = sphi 0, %s40
      %s22 = sphi 0, %s36
      %s23 = sphi 0, %s32
      %s24 = sphi 0, %s21
      %s25 = sphi 0, %s22
      %s26 = sphi 0, %s23
      %s27 = sphi 0, %s24
      %s28 = sphi 0, %s25
      %s29 = sphi 0, %s26
      %s41 = sphi 0, %s41
      %s43 = sphi 0, %s41
      %s44 = sphi 0, %s43
      %s58 = sphi 0, %s44
      %s68 = sphi 0, %s70
      %s71 = sphi 0, %s68
      %s72 = sphi 0, %s71
      %s88 = sphi 0, %s72
      %s96 = sphi 0, %s98
      %s99 = sphi 0, %s96
      %s100 = sphi 0, %s99
      %s116 = sphi 0, %s100
      %s120 = sphi 0, %s120
      %s122 = sphi 0, %s120
      %s123 = sphi 0, %s122
      %s137 = sphi 0, %s123
    $region4: #{_mlp_fused.1} parent=1 // loop_header_branch
      %17 = sbr.rel (%p15) target = $region8
    $region5: #{_mlp_fused.1} parent=1 // loop_body
      %s19 = ssub.s32 %s14, 1
      %s20 = ssub.s32 %s14, 2
      %s30 = sadd.s32 1, %s23
      %p31 = scmp.ge.s32.totalorder %s30, 1
      %s32 = scalar_select %p31, 0, %s30
      %s33 = sadd.s32 1, %s22
      %s34 = scalar_select %p31, %s33, %s22
      %p35 = scmp.ge.s32.totalorder %s34, 1
      %s36 = scalar_select %p35, 0, %s34
      %s37 = sadd.s32 1, %s21
      %s38 = scalar_select %p35, %s37, %s21
      %p39 = scmp.ge.s32.totalorder %s38, 3
      %s40 = scalar_select %p39, 0, %s38
      %s42 = sadd.s32 %s41, 1
      %p45 = scmp.eq.s32.totalorder %s14, 2
      %p46 = scmp.ne.s32.totalorder %s41, %s43
      %p47 = scmp.eq.s32.totalorder %s14, 0
      %p48 = por %p46, %p47
      %p49 = scmp.ne.s32.totalorder %s41, %s43
      %p50 = scmp.eq.s32.totalorder %s19, 2
      %p51 = por %p49, %p50
      %p52 = scmp.ne.s32.totalorder %s43, %s44
      %p53 = scmp.eq.s32.totalorder %s19, 0
      %p54 = por %p52, %p53
      %p55 = scmp.ne.s32.totalorder %s43, %s44
      %p56 = scmp.eq.s32.totalorder %s20, 2
      %p57 = por %p55, %p56
      %p59 = scmp.ne.s32.totalorder %s44, %s58
      %p60 = scmp.eq.s32.totalorder %s20, 0
      %p61 = por %p59, %p60
      %s62 = ssub.s32 %s21, %s40
      %s63 = ssub.s32 %s23, %s32
      %s64 = sor.u32 %s62, %s63
      %s65 = ssub.s32 %s22, %s36
      %s66 = sor.u32 %s64, %s65
      %p67 = scmp.eq.s32.totalorder %s66, 0
      %s69 = sadd.s32 %s68, 1
      %s70 = scalar_select %p67, %s68, %s69
      %p73 = pneg %p67
      %p74 = scmp.eq.s32.totalorder %s14, 2
      %p75 = por %p73, %p74
      %p76 = scmp.ne.s32.totalorder %s68, %s71
      %p77 = scmp.eq.s32.totalorder %s14, 0
      %p78 = por %p76, %p77
      %p79 = scmp.ne.s32.totalorder %s68, %s71
      %p80 = scmp.eq.s32.totalorder %s19, 2
      %p81 = por %p79, %p80
      %p82 = scmp.ne.s32.totalorder %s71, %s72
      %p83 = scmp.eq.s32.totalorder %s19, 0
      %p84 = por %p82, %p83
      %p85 = scmp.ne.s32.totalorder %s71, %s72
      %p86 = scmp.eq.s32.totalorder %s20, 2
      %p87 = por %p85, %p86
      %p89 = scmp.ne.s32.totalorder %s72, %s88
      %p90 = scmp.eq.s32.totalorder %s20, 0
      %p91 = por %p89, %p90
      %s92 = ssub.s32 %s21, %s40
      %s93 = ssub.s32 %s22, %s36
      %s94 = sor.u32 %s92, %s93
      %p95 = scmp.eq.s32.totalorder %s94, 0
      %s97 = sadd.s32 %s96, 1
      %s98 = scalar_select %p95, %s96, %s97
      %p101 = pneg %p95
      %p102 = scmp.eq.s32.totalorder %s14, 2
      %p103 = por %p101, %p102
      %p104 = scmp.ne.s32.totalorder %s96, %s99
      %p105 = scmp.eq.s32.totalorder %s14, 0
      %p106 = por %p104, %p105
      %p107 = scmp.ne.s32.totalorder %s96, %s99
      %p108 = scmp.eq.s32.totalorder %s19, 2
      %p109 = por %p107, %p108
      %p110 = scmp.ne.s32.totalorder %s99, %s100
      %p111 = scmp.eq.s32.totalorder %s19, 0
      %p112 = por %p110, %p111
      %p113 = scmp.ne.s32.totalorder %s99, %s100
      %p114 = scmp.eq.s32.totalorder %s20, 2
      %p115 = por %p113, %p114
      %p117 = scmp.ne.s32.totalorder %s100, %s116
      %p118 = scmp.eq.s32.totalorder %s20, 0
      %p119 = por %p117, %p118
      %s121 = sadd.s32 %s120, 1
      %p124 = scmp.eq.s32.totalorder %s14, 2
      %p125 = scmp.ne.s32.totalorder %s120, %s122
      %p126 = scmp.eq.s32.totalorder %s14, 0
      %p127 = por %p125, %p126
      %p128 = scmp.ne.s32.totalorder %s120, %s122
      %p129 = scmp.eq.s32.totalorder %s19, 2
      %p130 = por %p128, %p129
      %p131 = scmp.ne.s32.totalorder %s122, %s123
      %p132 = scmp.eq.s32.totalorder %s19, 0
      %p133 = por %p131, %p132
      %p134 = scmp.ne.s32.totalorder %s122, %s123
      %p135 = scmp.eq.s32.totalorder %s20, 2
      %p136 = por %p134, %p135
      %p138 = scmp.ne.s32.totalorder %s123, %s137
      %p139 = scmp.eq.s32.totalorder %s20, 0
      %p140 = por %p138, %p139
      %p141 = scmp.le.s32.totalorder 1, %s14
      %p142 = scmp.lt.s32.totalorder %s14, 4
      %p143 = pnand %p141, %p142
      %p144 = pneg %p143
      // Predicated region
      $region9: #{_mlp_fused.1} parent=5 // pred_check
        _
      $region10: #{_mlp_fused.1} parent=5 // pred_check_branch
        %146 = sbr.rel (%p143) target = $region12
      $region11: #{_mlp_fused.1} parent=5 // pred_region
        %s147 = ssub.s32 %s14, 1
        // Predicated region
        $region13: #{_mlp_fused.1} parent=11 // pred_check
          %p148 = pneg %p54
        $region14: #{_mlp_fused.1} parent=11 // pred_check_branch
          %150 = sbr.rel (%p148) target = $region16
        $region15: #{_mlp_fused.1} parent=11 // pred_region
          %s152 = ssub.s32 128, 128
          %153 = vsyncadd [#allocation6], %s152
          %s154 = sshll.u32 [#allocation5], 4
          %s155 = int_to_ptr.vmem [resolvable:$true] %s154
          %160 = dma.hbm_to_vmem [thread:$0]  %s0, 128, %s155, [#allocation6], 64, 64, 4
        $region16: #{_mlp_fused.1} parent=11 // pred_fallthru
          _
      $region12: #{_mlp_fused.1} parent=5 // pred_fallthru
        _
      %p161 = scmp.lt.s32.totalorder %s14, 3
      // Predicated region
      $region17: #{_mlp_fused.1} parent=5 // pred_check
        %p162 = pneg %p161
      $region18: #{_mlp_fused.1} parent=5 // pred_check_branch
        %164 = sbr.rel (%p162) target = $region20
      $region19: #{_mlp_fused.1} parent=5 // pred_region
        // Predicated region
        $region21: #{_mlp_fused.1} parent=19 // pred_check
          %p165 = pneg %p78
        $region22: #{_mlp_fused.1} parent=19 // pred_check_branch
          %167 = sbr.rel (%p165) target = $region24
        $region23: #{_mlp_fused.1} parent=19 // pred_region
          %s168 = sand.u32 %s68, 1
          %s169 = scalar_lea.sflag [#allocation9], %s168
          %s170 = sand.u32 %s68, 1
          %s171 = smul.addr %s170, 64
          %s172 = scalar_lea.vmem [#allocation8], %s171
          %s173 = smul.u32 16, %s23
          %s175 = ssub.s32 1024, 1024
          %176 = vsyncadd %s169, %s175
          %s177 = sadd.s32 %s22, %s173
          %s178 = smul.addr %s21, 16
          %s179 = sadd.s32 %s177, %s178
          %s180 = smul.addr %s179, 64
          %s181 = scalar_lea.hbm %s1, %s180
          %s182 = sshll.u32 %s172, 4
          %s183 = int_to_ptr.vmem [resolvable:$true] %s182
          %188 = dma.hbm_to_vmem [thread:$0]  %s181, 1024, %s183, %s169, 64, 64, 4
        $region24: #{_mlp_fused.1} parent=19 // pred_fallthru
          _
        // Predicated region
        $region25: #{_mlp_fused.1} parent=19 // pred_check
          %p189 = pneg %p106
        $region26: #{_mlp_fused.1} parent=19 // pred_check_branch
          %191 = sbr.rel (%p189) target = $region28
        $region27: #{_mlp_fused.1} parent=19 // pred_region
          %p192 = scmp.lt.s32.totalorder %s21, 2
          %s193 = scalar_select %p192, %s21, 2
          %p194 = scmp.lt.s32.totalorder %s22, 0
          %s195 = scalar_select %p194, %s22, 0
          %s196 = sadd.s32 %s195, %s193
          %s197 = scalar_lea.vmem %s2, %s196
        $region28: #{_mlp_fused.1} parent=19 // pred_fallthru
          _
      $region20: #{_mlp_fused.1} parent=5 // pred_fallthru
        _
      %p198 = scmp.le.s32.totalorder 1, %s14
      %p199 = scmp.lt.s32.totalorder %s14, 4
      %p200 = pnand %p198, %p199
      %p201 = pneg %p200
      // Predicated region
      $region29: #{_mlp_fused.1} parent=5 // pred_check
        _
      $region30: #{_mlp_fused.1} parent=5 // pred_check_branch
        %203 = sbr.rel (%p200) target = $region32
      $region31: #{_mlp_fused.1} parent=5 // pred_region
        %s204 = ssub.s32 %s14, 1
        // Predicated region
        $region33: #{_mlp_fused.1} parent=31 // pred_check
          %p205 = pneg %p54
        $region34: #{_mlp_fused.1} parent=31 // pred_check_branch
          %207 = sbr.rel (%p205) target = $region36
        $region35: #{_mlp_fused.1} parent=31 // pred_region
          %208 = dma.done [#allocation6], 128
        $region36: #{_mlp_fused.1} parent=31 // pred_fallthru
          _
        %s209 = sand.u32 %s71, 1
        %s210 = scalar_lea.sflag [#allocation9], %s209
        %s211 = sand.u32 %s71, 1
        %s212 = smul.addr %s211, 64
        %s213 = scalar_lea.vmem [#allocation8], %s212
        // Predicated region
        $region37: #{_mlp_fused.1} parent=31 // pred_check
          %p214 = pneg %p84
        $region38: #{_mlp_fused.1} parent=31 // pred_check_branch
          %216 = sbr.rel (%p214) target = $region40
        $region39: #{_mlp_fused.1} parent=31 // pred_region
          %217 = dma.done %s210, 1024
        $region40: #{_mlp_fused.1} parent=31 // pred_fallthru
          _
        %p218 = pneg %p54
        %p219 = pneg %p51
        %s220 = sand.u32 %s71, 1
        %s221 = scalar_lea.sflag [#allocation9], %s220
        %s222 = sand.u32 %s71, 1
        %s223 = smul.addr %s222, 64
        %s224 = scalar_lea.vmem [#allocation8], %s223
        %p225 = pneg %p84
        %p226 = pneg %p81
        %p227 = scmp.lt.s32.totalorder %s24, 2
        %s228 = scalar_select %p227, %s24, 2
        %p229 = scmp.lt.s32.totalorder %s25, 0
        %s230 = scalar_select %p229, %s25, 0
        %s231 = sadd.s32 %s230, %s228
        %s232 = scalar_lea.vmem %s2, %s231
        %p233 = pneg %p112
        %p234 = pneg %p109
        %p235 = pneg %p133
        %p236 = pneg %p130
        %s237 = smul.u32 16, %s26
        %p238 = scmp.lt.s32.totalorder %s24, 2
        %s239 = scalar_select %p238, %s24, 2
        %p240 = scmp.lt.s32.totalorder %s25, 0
        %s241 = scalar_select %p240, %s25, 0
        %s242 = sadd.s32 %s241, %s239
        %s243 = scalar_lea.vmem %s2, %s242
        %p245 = scmp.eq.s32.totalorder %s24, 0
        %p246 = scmp.eq.s32.totalorder %s25, 0
        %p247 = pnand %p245, %p246
        %p248 = pneg %p247
        %p249 = scmp.eq.s32.totalorder %s26, 0
        %p250 = pnand %p248, %p249
        %p251 = pneg %p250
        // Predicated region
        $region41: #{_mlp_fused.1} parent=31 // pred_check
          _
        $region42: #{_mlp_fused.1} parent=31 // pred_check_branch
          %253 = sbr.rel (%p250) target = $region44
        $region43: #{_mlp_fused.1} parent=31 // pred_region
          %254 = vst [vmem:[#allocation2] sm:$0xf] 0
          %255 = vst [vmem:[#allocation2 + $0x4] sm:$0xf] 0
          %256 = vst [vmem:[#allocation3] sm:$0xf] 0
          %257 = vst [vmem:[#allocation3 + $0x4] sm:$0xf] 0
          %v258 = vld [vmem:[#allocation5] sm:$0xf]
          %v259 = vld [vmem:[#allocation5 + $0x4] sm:$0xf]
          %260 = vst [vmem:[#allocation2] sm:$0xf] %v258
          %261 = vst [vmem:[#allocation2 + $0x4] sm:$0xf] %v259
        $region44: #{_mlp_fused.1} parent=31 // pred_fallthru
          _
        %s262 = smul.u32 %s26, 128
        %s263 = smul.u32 %s25, 128
        %p264 = scmp.lt.s32.totalorder %s24, 0
        %s265 = ssub.s32 0, %s24
        %s266 = scalar_select %p264, %s265, %s24
        %s267 = sand.u32 %s266, 1
        %s268 = ssub.s32 0, %s267
        %s269 = scalar_select %p264, %s268, %s267
        %p270 = scmp.ne.s32.totalorder %s269, 0
        %p271 = scmp.lt.s32.totalorder %s269, 0
        %p272 = pnand %p271, %p270
        %p273 = pneg %p272
        %s274 = sadd.s32 %s269, 2
        %s275 = scalar_select %p273, %s274, %s269
        %p276 = scmp.eq.s32.totalorder %s275, 0
        // Predicated region
        $region45: #{_mlp_fused.1} parent=31 // pred_check
          %p277 = pneg %p276
        $region46: #{_mlp_fused.1} parent=31 // pred_check_branch
          %279 = sbr.rel (%p277) target = $region48
        $region47: #{_mlp_fused.1} parent=31 // pred_region
          %s280 = sshra.s32 %s262, 7
          %s281 = sand.u32 %s262, 127
          %s282 = smul.addr %s280, 4
          %s283 = scalar_lea.vmem [#allocation2], %s282
          %v284 = vld [vmem:[%s283] sm:$0xf]
          %v285 = vld [vmem:[%s283 + $0x4] sm:$0xf]
          %v286 = vld [vmem:[%s213] sm:$0xf]
          %v287 = vld [vmem:[%s213 + $0x4] sm:$0xf]
          %v288 = vld [vmem:[%s213 + $0x8] sm:$0xf]
          %v289 = vld [vmem:[%s213 + $0xc] sm:$0xf]
          %v290 = vld [vmem:[%s213 + $0x10] sm:$0xf]
          %v291 = vld [vmem:[%s213 + $0x14] sm:$0xf]
          %v292 = vld [vmem:[%s213 + $0x18] sm:$0xf]
          %v293 = vld [vmem:[%s213 + $0x1c] sm:$0xf]
          %v294 = vld [vmem:[%s213 + $0x20] sm:$0xf]
          %v295 = vld [vmem:[%s213 + $0x24] sm:$0xf]
          %v296 = vld [vmem:[%s213 + $0x28] sm:$0xf]
          %v297 = vld [vmem:[%s213 + $0x2c] sm:$0xf]
          %v298 = vld [vmem:[%s213 + $0x30] sm:$0xf]
          %v299 = vld [vmem:[%s213 + $0x34] sm:$0xf]
          %v300 = vld [vmem:[%s213 + $0x38] sm:$0xf]
          %v301 = vld [vmem:[%s213 + $0x3c] sm:$0xf]
          %v304 = vunpack.c.l.b16 %v284
          %v305 = vunpack.c.l.b16 %v285
          %v306 = vpack.c.b16 %v305, %v304
          %v324 = vunpack.c.l.b16 %v286
          %v325 = vunpack.c.l.b16 %v287
          %v326 = vunpack.c.l.b16 %v288
          %v327 = vunpack.c.l.b16 %v289
          %v328 = vunpack.c.l.b16 %v290
          %v329 = vunpack.c.l.b16 %v291
          %v330 = vunpack.c.l.b16 %v292
          %v331 = vunpack.c.l.b16 %v293
          %v332 = vunpack.c.l.b16 %v294
          %v333 = vunpack.c.l.b16 %v295
          %v334 = vunpack.c.l.b16 %v296
          %v335 = vunpack.c.l.b16 %v297
          %v336 = vunpack.c.l.b16 %v298
          %v337 = vunpack.c.l.b16 %v299
          %v338 = vunpack.c.l.b16 %v300
          %v339 = vunpack.c.l.b16 %v301
          %v340 = vpack.c.b16 %v325, %v324
          %v341 = vpack.c.b16 %v327, %v326
          %v342 = vpack.c.b16 %v329, %v328
          %v343 = vpack.c.b16 %v331, %v330
          %v344 = vpack.c.b16 %v333, %v332
          %v345 = vpack.c.b16 %v335, %v334
          %v346 = vpack.c.b16 %v337, %v336
          %v347 = vpack.c.b16 %v339, %v338
          %356 = vmatprep.subr.bf16.mxu0 0
          %357 = vmatpush1.bf16.msra.mxu0 %v347
          %358 = vmatprep.subr.bf16.mxu0 0
          %359 = vmatpush1.bf16.msra.mxu0 %v346
          %360 = vmatprep.subr.bf16.mxu0 0
          %361 = vmatpush1.bf16.msra.mxu0 %v345
          %362 = vmatprep.subr.bf16.mxu0 0
          %363 = vmatpush1.bf16.msra.mxu0 %v344
          %364 = vmatprep.subr.bf16.mxu0 0
          %365 = vmatpush1.bf16.msra.mxu0 %v343
          %366 = vmatprep.subr.bf16.mxu0 0
          %367 = vmatpush1.bf16.msra.mxu0 %v342
          %368 = vmatprep.subr.bf16.mxu0 0
          %369 = vmatpush1.bf16.msra.mxu0 %v341
          %370 = vmatprep.subr.bf16.mxu0 0
          %371 = vmatpush1.bf16.msra.mxu0 %v340
          %372 = vmatprep.subr.bf16.mxu0 0
          %373 = vmatpush2.bf16.msra.mxu0 0
          %374 = vmatprep.subr.bf16.mxu0 0
          %375 = vmatpush2.bf16.msra.mxu0 0
          %376 = vmatprep.subr.bf16.mxu0 0
          %377 = vmatpush2.bf16.msra.mxu0 0
          %378 = vmatprep.subr.bf16.mxu0 0
          %379 = vmatpush2.bf16.msra.mxu0 0
          %380 = vmatprep.subr.bf16.mxu0 0
          %381 = vmatpush2.bf16.msra.mxu0 0
          %382 = vmatprep.subr.bf16.mxu0 0
          %383 = vmatpush2.bf16.msra.mxu0 0
          %384 = vmatprep.subr.bf16.mxu0 0
          %385 = vmatpush2.bf16.msra.mxu0 0
          %386 = vmatprep.subr.bf16.mxu0 0
          %387 = vmatpush2.bf16.msra.mxu0 0
          %388 = vmatprep.mubr.bf16.mxu0 0
          %389 = vmatmul.mubr.bf16.gmra.mxu0 %v306
          %v390 = vpop.f32.mrf.mxu0
          %v391 = vadd.f32 0.0, %v390
          %v392 = vpop.f32.mrf.mxu0
          %v393 = vpop.f32.mrf.mxu0
          %v394 = vadd.f32 0.0, %v393
          %v395 = vpop.f32.mrf.mxu0
          %396 = vdwg.mxu0
          // Predicated region
          $region49: #{_mlp_fused.1} parent=47 // pred_check
            %p397 = pneg %p249
          $region50: #{_mlp_fused.1} parent=47 // pred_check_branch
            %399 = sbr.rel (%p397) target = $region52
          $region51: #{_mlp_fused.1} parent=47 // pred_region
            %v400 = vld [vmem:[%s243] sm:$0x1]
            %v402 = vlaneseq
            %v403 = vshrl.u32 %v402, 7
            %v404 = vsub.s32 0, %v403
            %v405 = vrot.slane %v400, %v404
            %v407 = vadd.f32 %v391, %v405
            %v408 = vadd.f32 %v394, %v405
            %409 = vst [vmem:[#allocation4] sm:$0xff] %v407
            %410 = vst [vmem:[#allocation4 + $0x8] sm:$0xff] %v408
          $region52: #{_mlp_fused.1} parent=47 // pred_fallthru
            _
          %p411 = scmp.gt.s32.totalorder %s26, 0
          // Predicated region
          $region53: #{_mlp_fused.1} parent=47 // pred_check
            %p412 = pneg %p411
          $region54: #{_mlp_fused.1} parent=47 // pred_check_branch
            %414 = sbr.rel (%p412) target = $region56
          $region55: #{_mlp_fused.1} parent=47 // pred_region
            %v415 = vld [vmem:[#allocation4] sm:$0xff]
            %v416 = vld [vmem:[#allocation4 + $0x8] sm:$0xff]
            %v417 = vadd.f32 %v415, %v391
            %v418 = vadd.f32 %v416, %v394
            %419 = vst [vmem:[#allocation4] sm:$0xff] %v417
            %420 = vst [vmem:[#allocation4 + $0x8] sm:$0xff] %v418
          $region56: #{_mlp_fused.1} parent=47 // pred_fallthru
            _
          // Predicated region
          $region57: #{_mlp_fused.1} parent=47 // pred_check
            %p421 = pneg %p249
          $region58: #{_mlp_fused.1} parent=47 // pred_check_branch
            %423 = sbr.rel (%p421) target = $region60
          $region59: #{_mlp_fused.1} parent=47 // pred_region
            %v424 = vld [vmem:[#allocation4] sm:$0xff]
            %v425 = vld [vmem:[#allocation4 + $0x8] sm:$0xff]
            %v426 = vmax.f32 %v424, 0.0
            %v427 = vmax.f32 %v425, 0.0
            %p428 = scmp.eq.s32.totalorder %s24, 2
            %s429 = scalar_select %p428, 1, 0
            %v430 = vstv %s429
            %vm431 = vcmp.eq.s32.totalorder %v430, 1
            %v432 = vsel %vm431, %v424, %v426
            %v433 = vsel %vm431, %v425, %v427
            %v434 = vpack.c.bf16 %v433, %v432
            %v436 = vunpack.c.l.b16 %v434
            %v437 = vunpack.c.h.b16 %v434
            %v438 = vpack.c.b16 %v436, %v436
            %v439 = vpack.c.b16 %v437, %v437
            %s442 = sshra.s32 %s263, 7
            %s443 = sand.u32 %s263, 127
            %s444 = smul.addr %s442, 4
            %s445 = scalar_lea.vmem [#allocation3], %s444
            %446 = vst [vmem:[%s445] sm:$0xf] %v438
            %447 = vst [vmem:[%s445 + $0x4] sm:$0xf] %v439
            // Predicated region
            $region61: #{_mlp_fused.1} parent=59 // pred_check
              %p448 = pneg %p428
            $region62: #{_mlp_fused.1} parent=59 // pred_check_branch
              %450 = sbr.rel (%p448) target = $region64
            $region63: #{_mlp_fused.1} parent=59 // pred_region
              %s451 = scalar_lea.vmem [#allocation10], %s442
              %452 = vst [vmem:[%s451] sm:$0xff] %v432
              %453 = vst [vmem:[%s451 + $0x8] sm:$0xff] %v433
            $region64: #{_mlp_fused.1} parent=59 // pred_fallthru
              _
          $region60: #{_mlp_fused.1} parent=47 // pred_fallthru
            _
        $region48: #{_mlp_fused.1} parent=31 // pred_fallthru
          _
        %p454 = scmp.eq.s32.totalorder %s275, 1
        // Predicated region
        $region65: #{_mlp_fused.1} parent=31 // pred_check
          %p455 = pneg %p454
        $region66: #{_mlp_fused.1} parent=31 // pred_check_branch
          %457 = sbr.rel (%p455) target = $region68
        $region67: #{_mlp_fused.1} parent=31 // pred_region
          %s458 = sshra.s32 %s262, 7
          %s459 = sand.u32 %s262, 127
          %s460 = smul.addr %s458, 4
          %s461 = scalar_lea.vmem [#allocation3], %s460
          %v462 = vld [vmem:[%s461] sm:$0xf]
          %v463 = vld [vmem:[%s461 + $0x4] sm:$0xf]
          %v464 = vld [vmem:[%s213] sm:$0xf]
          %v465 = vld [vmem:[%s213 + $0x4] sm:$0xf]
          %v466 = vld [vmem:[%s213 + $0x8] sm:$0xf]
          %v467 = vld [vmem:[%s213 + $0xc] sm:$0xf]
          %v468 = vld [vmem:[%s213 + $0x10] sm:$0xf]
          %v469 = vld [vmem:[%s213 + $0x14] sm:$0xf]
          %v470 = vld [vmem:[%s213 + $0x18] sm:$0xf]
          %v471 = vld [vmem:[%s213 + $0x1c] sm:$0xf]
          %v472 = vld [vmem:[%s213 + $0x20] sm:$0xf]
          %v473 = vld [vmem:[%s213 + $0x24] sm:$0xf]
          %v474 = vld [vmem:[%s213 + $0x28] sm:$0xf]
          %v475 = vld [vmem:[%s213 + $0x2c] sm:$0xf]
          %v476 = vld [vmem:[%s213 + $0x30] sm:$0xf]
          %v477 = vld [vmem:[%s213 + $0x34] sm:$0xf]
          %v478 = vld [vmem:[%s213 + $0x38] sm:$0xf]
          %v479 = vld [vmem:[%s213 + $0x3c] sm:$0xf]
          %v482 = vunpack.c.l.b16 %v462
          %v483 = vunpack.c.l.b16 %v463
          %v484 = vpack.c.b16 %v483, %v482
          %v502 = vunpack.c.l.b16 %v464
          %v503 = vunpack.c.l.b16 %v465
          %v504 = vunpack.c.l.b16 %v466
          %v505 = vunpack.c.l.b16 %v467
          %v506 = vunpack.c.l.b16 %v468
          %v507 = vunpack.c.l.b16 %v469
          %v508 = vunpack.c.l.b16 %v470
          %v509 = vunpack.c.l.b16 %v471
          %v510 = vunpack.c.l.b16 %v472
          %v511 = vunpack.c.l.b16 %v473
          %v512 = vunpack.c.l.b16 %v474
          %v513 = vunpack.c.l.b16 %v475
          %v514 = vunpack.c.l.b16 %v476
          %v515 = vunpack.c.l.b16 %v477
          %v516 = vunpack.c.l.b16 %v478
          %v517 = vunpack.c.l.b16 %v479
          %v518 = vpack.c.b16 %v503, %v502
          %v519 = vpack.c.b16 %v505, %v504
          %v520 = vpack.c.b16 %v507, %v506
          %v521 = vpack.c.b16 %v509, %v508
          %v522 = vpack.c.b16 %v511, %v510
          %v523 = vpack.c.b16 %v513, %v512
          %v524 = vpack.c.b16 %v515, %v514
          %v525 = vpack.c.b16 %v517, %v516
          %534 = vmatprep.subr.bf16.mxu0 0
          %535 = vmatpush1.bf16.msra.mxu0 %v525
          %536 = vmatprep.subr.bf16.mxu0 0
          %537 = vmatpush1.bf16.msra.mxu0 %v524
          %538 = vmatprep.subr.bf16.mxu0 0
          %539 = vmatpush1.bf16.msra.mxu0 %v523
          %540 = vmatprep.subr.bf16.mxu0 0
          %541 = vmatpush1.bf16.msra.mxu0 %v522
          %542 = vmatprep.subr.bf16.mxu0 0
          %543 = vmatpush1.bf16.msra.mxu0 %v521
          %544 = vmatprep.subr.bf16.mxu0 0
          %545 = vmatpush1.bf16.msra.mxu0 %v520
          %546 = vmatprep.subr.bf16.mxu0 0
          %547 = vmatpush1.bf16.msra.mxu0 %v519
          %548 = vmatprep.subr.bf16.mxu0 0
          %549 = vmatpush1.bf16.msra.mxu0 %v518
          %550 = vmatprep.subr.bf16.mxu0 0
          %551 = vmatpush2.bf16.msra.mxu0 0
          %552 = vmatprep.subr.bf16.mxu0 0
          %553 = vmatpush2.bf16.msra.mxu0 0
          %554 = vmatprep.subr.bf16.mxu0 0
          %555 = vmatpush2.bf16.msra.mxu0 0
          %556 = vmatprep.subr.bf16.mxu0 0
          %557 = vmatpush2.bf16.msra.mxu0 0
          %558 = vmatprep.subr.bf16.mxu0 0
          %559 = vmatpush2.bf16.msra.mxu0 0
          %560 = vmatprep.subr.bf16.mxu0 0
          %561 = vmatpush2.bf16.msra.mxu0 0
          %562 = vmatprep.subr.bf16.mxu0 0
          %563 = vmatpush2.bf16.msra.mxu0 0
          %564 = vmatprep.subr.bf16.mxu0 0
          %565 = vmatpush2.bf16.msra.mxu0 0
          %566 = vmatprep.mubr.bf16.mxu0 0
          %567 = vmatmul.mubr.bf16.gmra.mxu0 %v484
          %v568 = vpop.f32.mrf.mxu0
          %v569 = vadd.f32 0.0, %v568
          %v570 = vpop.f32.mrf.mxu0
          %v571 = vpop.f32.mrf.mxu0
          %v572 = vadd.f32 0.0, %v571
          %v573 = vpop.f32.mrf.mxu0
          %574 = vdwg.mxu0
          // Predicated region
          $region69: #{_mlp_fused.1} parent=67 // pred_check
            %p575 = pneg %p249
          $region70: #{_mlp_fused.1} parent=67 // pred_check_branch
            %577 = sbr.rel (%p575) target = $region72
          $region71: #{_mlp_fused.1} parent=67 // pred_region
            %v578 = vld [vmem:[%s243] sm:$0x1]
            %v580 = vlaneseq
            %v581 = vshrl.u32 %v580, 7
            %v582 = vsub.s32 0, %v581
            %v583 = vrot.slane %v578, %v582
            %v585 = vadd.f32 %v569, %v583
            %v586 = vadd.f32 %v572, %v583
            %587 = vst [vmem:[#allocation4] sm:$0xff] %v585
            %588 = vst [vmem:[#allocation4 + $0x8] sm:$0xff] %v586
          $region72: #{_mlp_fused.1} parent=67 // pred_fallthru
            _
          %p589 = scmp.gt.s32.totalorder %s26, 0
          // Predicated region
          $region73: #{_mlp_fused.1} parent=67 // pred_check
            %p590 = pneg %p589
          $region74: #{_mlp_fused.1} parent=67 // pred_check_branch
            %592 = sbr.rel (%p590) target = $region76
          $region75: #{_mlp_fused.1} parent=67 // pred_region
            %v593 = vld [vmem:[#allocation4] sm:$0xff]
            %v594 = vld [vmem:[#allocation4 + $0x8] sm:$0xff]
            %v595 = vadd.f32 %v593, %v569
            %v596 = vadd.f32 %v594, %v572
            %597 = vst [vmem:[#allocation4] sm:$0xff] %v595
            %598 = vst [vmem:[#allocation4 + $0x8] sm:$0xff] %v596
          $region76: #{_mlp_fused.1} parent=67 // pred_fallthru
            _
          // Predicated region
          $region77: #{_mlp_fused.1} parent=67 // pred_check
            %p599 = pneg %p249
          $region78: #{_mlp_fused.1} parent=67 // pred_check_branch
            %601 = sbr.rel (%p599) target = $region80
          $region79: #{_mlp_fused.1} parent=67 // pred_region
            %v602 = vld [vmem:[#allocation4] sm:$0xff]
            %v603 = vld [vmem:[#allocation4 + $0x8] sm:$0xff]
            %v604 = vmax.f32 %v602, 0.0
            %v605 = vmax.f32 %v603, 0.0
            %p606 = scmp.eq.s32.totalorder %s24, 2
            %s607 = scalar_select %p606, 1, 0
            %v608 = vstv %s607
            %vm609 = vcmp.eq.s32.totalorder %v608, 1
            %v610 = vsel %vm609, %v602, %v604
            %v611 = vsel %vm609, %v603, %v605
            %v612 = vpack.c.bf16 %v611, %v610
            %v614 = vunpack.c.l.b16 %v612
            %v615 = vunpack.c.h.b16 %v612
            %v616 = vpack.c.b16 %v614, %v614
            %v617 = vpack.c.b16 %v615, %v615
            %s620 = sshra.s32 %s263, 7
            %s621 = sand.u32 %s263, 127
            %s622 = smul.addr %s620, 4
            %s623 = scalar_lea.vmem [#allocation2], %s622
            %624 = vst [vmem:[%s623] sm:$0xf] %v616
            %625 = vst [vmem:[%s623 + $0x4] sm:$0xf] %v617
            // Predicated region
            $region81: #{_mlp_fused.1} parent=79 // pred_check
              %p626 = pneg %p606
            $region82: #{_mlp_fused.1} parent=79 // pred_check_branch
              %628 = sbr.rel (%p626) target = $region84
            $region83: #{_mlp_fused.1} parent=79 // pred_region
              %s629 = scalar_lea.vmem [#allocation10], %s620
              %630 = vst [vmem:[%s629] sm:$0xff] %v610
              %631 = vst [vmem:[%s629 + $0x8] sm:$0xff] %v611
            $region84: #{_mlp_fused.1} parent=79 // pred_fallthru
              _
          $region80: #{_mlp_fused.1} parent=67 // pred_fallthru
            _
        $region68: #{_mlp_fused.1} parent=31 // pred_fallthru
          _
        // Predicated region
        $region85: #{_mlp_fused.1} parent=31 // pred_check
          %p632 = pneg %p130
        $region86: #{_mlp_fused.1} parent=31 // pred_check_branch
          %634 = sbr.rel (%p632) target = $region88
        $region87: #{_mlp_fused.1} parent=31 // pred_region
          %s636 = ssub.s32 256, 256
          %637 = vsyncadd [#allocation7], %s636
          %s638 = sshll.u32 [#allocation10], 4
          %s639 = int_to_ptr.vmem [resolvable:$true] %s638
          %644 = dma.vmem_to_hbm [thread:$0]  %s639, 256, %s3, [#allocation7], 128, 128, 8
        $region88: #{_mlp_fused.1} parent=31 // pred_fallthru
          _
        // Predicated region
        $region89: #{_mlp_fused.1} parent=31 // pred_check
          %p645 = pneg %p130
        $region90: #{_mlp_fused.1} parent=31 // pred_check_branch
          %647 = sbr.rel (%p645) target = $region92
        $region91: #{_mlp_fused.1} parent=31 // pred_region
          %648 = dma.done [#allocation7], 256
        $region92: #{_mlp_fused.1} parent=31 // pred_fallthru
          _
      $region32: #{_mlp_fused.1} parent=5 // pred_fallthru
        _
      %p649 = scmp.le.s32.totalorder 2, %s14
      // Predicated region
      $region93: #{_mlp_fused.1} parent=5 // pred_check
        %p650 = pneg %p649
      $region94: #{_mlp_fused.1} parent=5 // pred_check_branch
        %652 = sbr.rel (%p650) target = $region96
      $region95: #{_mlp_fused.1} parent=5 // pred_region
        %s653 = ssub.s32 %s14, 2
      $region96: #{_mlp_fused.1} parent=5 // pred_fallthru
        _
    $region6: #{_mlp_fused.1} parent=1 // loop_footer
      %s18 = sadd.s32 1, %s14
    $region7: #{_mlp_fused.1} parent=1 // loop_footer_branch
      %13 = sbr.rel target = $region3
    $region8: #{_mlp_fused.1} parent=1 // loop_exit
      _
    %654 = vsyncpa [#allocation6], 1
    %s655 = scalar_lea.sflag [#allocation6], 1
    %656 = vsyncpa %s655, 1
    %657 = vsyncpa [#allocation9], 1
    %s658 = scalar_lea.sflag [#allocation9], 1
    %659 = vsyncpa %s658, 1
    %660 = vsyncpa [#allocation7], 1
    %s661 = scalar_lea.sflag [#allocation7], 1
    %662 = vsyncpa %s661, 1

</llo_original>
